<compile_context>
chip_gen: v5e
topology: v5e:2x2
jax: 0.10.0
libtpu: 0.0.40
codegen_flags: <defaults>
</compile_context>

<pallas_src>
import functools

import jax
import jax.numpy as jnp
from jax.experimental import pallas as pl
from jax.experimental.pallas import tpu as pltpu


def _round_up(n, m):
    return -(-n // m) * m


def _softplus(x):
    # Numerically stable softplus, matches torch.nn.Softplus (beta=1).
    return jnp.maximum(x, 0.0) + jnp.log1p(jnp.exp(-jnp.abs(x)))


def ssvae_encode_y_kernel(x_ref, w1_ref, b1_ref, w2_ref, b2_ref,
                          w3_ref, b3_ref, out_ref, *, num_classes):
    # x arrives f32; cast on the VPU to the weights' dtype (bf16 or f32).
    x = x_ref[...].astype(w1_ref.dtype)

    h1 = jnp.dot(x, w1_ref[...], preferred_element_type=jnp.float32) + b1_ref[...]
    h1 = _softplus(h1)

    h2 = jnp.dot(h1.astype(w2_ref.dtype), w2_ref[...],
                 preferred_element_type=jnp.float32) + b2_ref[...]
    h2 = _softplus(h2)

    logits = jnp.dot(h2.astype(w3_ref.dtype), w3_ref[...],
                     preferred_element_type=jnp.float32) + b3_ref[...]

    # Stable softmax over the lane-padded class axis. Padded class columns
    # carry a -1e30 bias so exp(.) underflows to exactly 0 for them.
    m = jnp.max(logits, axis=-1, keepdims=True)
    e = jnp.exp(logits - m)
    s = jnp.sum(e, axis=-1, keepdims=True)
    probs = e * pl.reciprocal(s, approx=False)   # exact: rows sum to 1

    # Store only the real classes: (tile_b, C) output, no padded f32 writeback.
    out_ref[...] = probs[:, :num_classes]


def prepare_encoder_y_params(w1, b1, w2, b2, w3, b3, *,
                             matmul_dtype=jnp.bfloat16):
    """One-time (hoisted) parameter prep: cast matmul weights, lane-pad the
    last layer's class dim to a multiple of 128, keep biases f32 (padded
    logit columns get a -1e30 bias => exactly zero softmax mass)."""
    num_classes = w3.shape[1]
    c_pad = _round_up(num_classes, 128)
    if c_pad != num_classes:
        w3 = jnp.pad(w3, ((0, 0), (0, c_pad - num_classes)))
        b3 = jnp.pad(b3, ((0, 0), (0, c_pad - num_classes)),
                     constant_values=-1e30)
    params = (w1.astype(matmul_dtype), jnp.asarray(b1, jnp.float32),
              w2.astype(matmul_dtype), jnp.asarray(b2, jnp.float32),
              w3.astype(matmul_dtype), jnp.asarray(b3, jnp.float32))
    return params, num_classes


def _choose_tile(B, tile_b):
    tile = max(8, _round_up(tile_b, 8))
    # Split large batches into >=2 (up to 4) programs so both v7x TensorCores
    # get work; never shrink below 512 rows (per-step overhead amortization).
    if B >= 2 * 512:
        n_prog = 4 if B >= 4 * 512 else 2
        tile = min(tile, max(512, _round_up(-(-B // n_prog), 8)))
    if tile >= B:
        return B          # single exact block over the whole batch
    return tile


@functools.partial(jax.jit, static_argnames=("num_classes", "tile_b"))
def ssvae_forward(x, params, *, num_classes, tile_b=1024):
    w1, b1, w2, b2, w3, b3 = params
    B, D_in = x.shape
    H1 = w1.shape[1]
    H2 = w2.shape[1]
    C_pad = w3.shape[1]
    C = num_classes

    tile = _choose_tile(B, tile_b)
    grid = (pl.cdiv(B, tile),)

    mm_bytes = jnp.dtype(w1.dtype).itemsize

    # VMEM budget: double-buffered blocks + f32 temporaries, 2x headroom.
    vmem_est = 2 * (
        2 * tile * D_in * 4                                       # f32 x tile
        + 2 * (D_in * H1 + H1 * H2 + H2 * C_pad) * mm_bytes       # weights
        + 2 * (H1 + H2 + C_pad) * 4                               # biases
        + 2 * tile * _round_up(C, 128) * 4                        # out tile
        + 3 * tile * max(H1, H2, C_pad) * 4                       # f32 temps
    )
    # Generation-aware cap: <= ~3/4 of physical VMEM (v7x has only 64 MiB/TC).
    try:
        phys_vmem = int(getattr(pltpu.get_tpu_info(), "vmem_capacity_bytes",
                                64 * 1024 * 1024))
    except Exception:
        phys_vmem = 64 * 1024 * 1024
    cap = min((3 * phys_vmem) // 4, 100 * 1024 * 1024)
    vmem_limit = int(min(max(vmem_est, 32 * 1024 * 1024), cap))

    cost = pl.CostEstimate(
        flops=2 * B * (D_in * H1 + H1 * H2 + H2 * C_pad),
        transcendentals=B * (2 * H1 + 2 * H2 + C_pad),
        bytes_accessed=(B * D_in * 4
                        + (D_in * H1 + H1 * H2 + H2 * C_pad) * mm_bytes
                        + (H1 + H2 + C_pad) * 4
                        + B * C * 4),
    )

    out = pl.pallas_call(
        functools.partial(ssvae_encode_y_kernel, num_classes=C),
        out_shape=jax.ShapeDtypeStruct((B, C), jnp.float32),
        grid_spec=pltpu.PrefetchScalarGridSpec(
            num_scalar_prefetch=0,
            grid=grid,
            in_specs=[
                pl.BlockSpec((tile, D_in), lambda i: (i, 0)),
                pl.BlockSpec((D_in, H1), lambda i: (0, 0)),
                pl.BlockSpec((1, H1), lambda i: (0, 0)),
                pl.BlockSpec((H1, H2), lambda i: (0, 0)),
                pl.BlockSpec((1, H2), lambda i: (0, 0)),
                pl.BlockSpec((H2, C_pad), lambda i: (0, 0)),
                pl.BlockSpec((1, C_pad), lambda i: (0, 0)),
            ],
            out_specs=pl.BlockSpec((tile, C), lambda i: (i, 0)),
        ),
        compiler_params=pltpu.CompilerParams(
            dimension_semantics=("parallel",),   # batch tiles shard across TCs
            vmem_limit_bytes=vmem_limit),
        cost_estimate=cost,
    )(x, w1, b1, w2, b2, w3, b3)
    return out


def init_encoder_y_params(key, input_dim, num_classes, dim_hidden_en_y):
    """Mimics SSVAE.__init__: weights ~ N(0, 0.001), 1-D params (biases) = 0."""
    dims = [input_dim] + list(dim_hidden_en_y) + [num_classes]
    params = []
    for i in range(len(dims) - 1):
        key, sub = jax.random.split(key)
        w = 0.001 * jax.random.normal(sub, (dims[i], dims[i + 1]), jnp.float32)
        b = jnp.zeros((1, dims[i + 1]), jnp.float32)
        params.extend([w, b])
    return params


def reference_forward(x, w1, b1, w2, b2, w3, b3):
    h1 = _softplus(x @ w1 + b1)
    h2 = _softplus(h1 @ w2 + b2)
    logits = h2 @ w3 + b3
    return jax.nn.softmax(logits, axis=-1)


if __name__ == "__main__":
    # Shapes consistent with the module: dim_in=(1, 16, 16) -> input_dim=256,
    # num_classes=10, dim_hidden_en_y=[128, 128] (small test config).
    key = jax.random.PRNGKey(0)
    B, D_in, C = 8, 16 * 16, 10
    hidden = [128, 128]

    key, kx = jax.random.split(key)
    x = jax.random.normal(kx, (B, D_in), jnp.float32)
    raw = init_encoder_y_params(key, D_in, C, hidden)
    ref = reference_forward(x, *raw)

    # Default (bf16 matmul) path; params prepared once, outside the hot path.
    params_bf16, ncls = prepare_encoder_y_params(*raw)
    y = jax.block_until_ready(ssvae_forward(x, params_bf16, num_classes=ncls))
    assert y.shape == (B, C)
    assert jnp.allclose(y, ref, atol=1e-3), float(jnp.max(jnp.abs(y - ref)))
    assert jnp.allclose(jnp.sum(y, axis=-1), 1.0, atol=1e-3)

    # f32 matmul path (strict parity).
    params_f32, _ = prepare_encoder_y_params(*raw, matmul_dtype=jnp.float32)
    y32 = jax.block_until_ready(ssvae_forward(x, params_f32, num_classes=ncls))
    assert jnp.allclose(y32, ref, atol=1e-3), float(jnp.max(jnp.abs(y32 - ref)))

    # Ragged batch: multiple grid programs + a partial last block (no padding).
    B2 = 300
    key, kx2 = jax.random.split(key)
    x2 = jax.random.normal(kx2, (B2, D_in), jnp.float32)
    y2 = jax.block_until_ready(
        ssvae_forward(x2, params_bf16, num_classes=ncls, tile_b=128))
    ref2 = reference_forward(x2, *raw)
    assert y2.shape == (B2, C)
    assert jnp.allclose(y2, ref2, atol=1e-3), float(jnp.max(jnp.abs(y2 - ref2)))
    assert jnp.allclose(jnp.sum(y2, axis=-1), 1.0, atol=1e-3)

    # TODO(synk): encode_z / decode (incl. BatchNorm) / distribution sampling are
    # not part of forward() and are left to plain JAX if ever needed.
    print("KERNEL_OK")
</pallas_src>

<mosaic_0001>
module attributes {stable_mosaic.version = 11 : i64} {
  func.func @ssvae_encode_y_kernel(%arg0: i32, %arg1: memref<8x256xf32, #tpu.memory_space<vmem>>, %arg2: memref<256x128xbf16, #tpu.memory_space<vmem>>, %arg3: memref<1x128xf32, #tpu.memory_space<vmem>>, %arg4: memref<128x128xbf16, #tpu.memory_space<vmem>>, %arg5: memref<1x128xf32, #tpu.memory_space<vmem>>, %arg6: memref<128x128xbf16, #tpu.memory_space<vmem>>, %arg7: memref<1x128xf32, #tpu.memory_space<vmem>>, %arg8: memref<8x10xf32, #tpu.memory_space<vmem>>) attributes {dimension_semantics = [#tpu.dimension_semantics<parallel>], iteration_bounds = array<i64: 1>, scalar_prefetch = 0 : i64, scratch_operands = 0 : i64, tpu.core_type = #tpu.core_type<tc>, window_params = [{transform_indices = @transform_0, window_bounds = array<i64: 8, 256>}, {pipeline_mode = #tpu.pipeline_mode<synchronous>, transform_indices = @transform_1, window_bounds = array<i64: 256, 128>}, {pipeline_mode = #tpu.pipeline_mode<synchronous>, transform_indices = @transform_2, window_bounds = array<i64: 1, 128>}, {pipeline_mode = #tpu.pipeline_mode<synchronous>, transform_indices = @transform_3, window_bounds = array<i64: 128, 128>}, {pipeline_mode = #tpu.pipeline_mode<synchronous>, transform_indices = @transform_4, window_bounds = array<i64: 1, 128>}, {pipeline_mode = #tpu.pipeline_mode<synchronous>, transform_indices = @transform_5, window_bounds = array<i64: 128, 128>}, {pipeline_mode = #tpu.pipeline_mode<synchronous>, transform_indices = @transform_6, window_bounds = array<i64: 1, 128>}, {transform_indices = @transform_7, window_bounds = array<i64: 8, 10>}]} {
    %c0 = arith.constant 0 : index
    %c0_0 = arith.constant 0 : index
    %0 = vector.load %arg1[%c0, %c0_0] : memref<8x256xf32, #tpu.memory_space<vmem>>, vector<8x256xf32>
    %1 = arith.truncf %0 : vector<8x256xf32> to vector<8x256xbf16>
    %c0_1 = arith.constant 0 : index
    %c0_2 = arith.constant 0 : index
    %2 = vector.load %arg2[%c0_1, %c0_2] : memref<256x128xbf16, #tpu.memory_space<vmem>>, vector<256x128xbf16>
    %cst = arith.constant dense<0.000000e+00> : vector<8x128xf32>
    %3 = tpu.matmul %1, %2, %cst {dimension_numbers = #tpu.dot_dimension_numbers<[1], [0], [0], [1], [0, 0, 1, 1], [], []>} : vector<8x256xbf16>, vector<256x128xbf16>, vector<8x128xf32> -> vector<8x128xf32>
    %c0_3 = arith.constant 0 : index
    %c0_4 = arith.constant 0 : index
    %4 = vector.load %arg3[%c0_3, %c0_4] : memref<1x128xf32, #tpu.memory_space<vmem>>, vector<1x128xf32>
    %5 = vector.broadcast %4 : vector<1x128xf32> to vector<8x128xf32>
    %6 = arith.addf %3, %5 : vector<8x128xf32>
    %cst_5 = arith.constant 0.000000e+00 : f32
    %7 = vector.broadcast %cst_5 : f32 to vector<8x128xf32>
    %8 = arith.maximumf %6, %7 : vector<8x128xf32>
    %9 = math.absf %6 : vector<8x128xf32>
    %cst_6 = arith.constant 0.000000e+00 : f32
    %10 = vector.broadcast %cst_6 : f32 to vector<8x128xf32>
    %11 = arith.subf %10, %9 : vector<8x128xf32>
    %12 = math.exp %11 : vector<8x128xf32>
    %13 = math.log1p %12 : vector<8x128xf32>
    %14 = arith.addf %8, %13 : vector<8x128xf32>
    %15 = arith.truncf %14 : vector<8x128xf32> to vector<8x128xbf16>
    %c0_7 = arith.constant 0 : index
    %c0_8 = arith.constant 0 : index
    %16 = vector.load %arg4[%c0_7, %c0_8] : memref<128x128xbf16, #tpu.memory_space<vmem>>, vector<128x128xbf16>
    %cst_9 = arith.constant dense<0.000000e+00> : vector<8x128xf32>
    %17 = tpu.matmul %15, %16, %cst_9 {dimension_numbers = #tpu.dot_dimension_numbers<[1], [0], [0], [1], [0, 0, 1, 1], [], []>} : vector<8x128xbf16>, vector<128x128xbf16>, vector<8x128xf32> -> vector<8x128xf32>
    %c0_10 = arith.constant 0 : index
    %c0_11 = arith.constant 0 : index
    %18 = vector.load %arg5[%c0_10, %c0_11] : memref<1x128xf32, #tpu.memory_space<vmem>>, vector<1x128xf32>
    %19 = vector.broadcast %18 : vector<1x128xf32> to vector<8x128xf32>
    %20 = arith.addf %17, %19 : vector<8x128xf32>
    %cst_12 = arith.constant 0.000000e+00 : f32
    %21 = vector.broadcast %cst_12 : f32 to vector<8x128xf32>
    %22 = arith.maximumf %20, %21 : vector<8x128xf32>
    %23 = math.absf %20 : vector<8x128xf32>
    %cst_13 = arith.constant 0.000000e+00 : f32
    %24 = vector.broadcast %cst_13 : f32 to vector<8x128xf32>
    %25 = arith.subf %24, %23 : vector<8x128xf32>
    %26 = math.exp %25 : vector<8x128xf32>
    %27 = math.log1p %26 : vector<8x128xf32>
    %28 = arith.addf %22, %27 : vector<8x128xf32>
    %29 = arith.truncf %28 : vector<8x128xf32> to vector<8x128xbf16>
    %c0_14 = arith.constant 0 : index
    %c0_15 = arith.constant 0 : index
    %30 = vector.load %arg6[%c0_14, %c0_15] : memref<128x128xbf16, #tpu.memory_space<vmem>>, vector<128x128xbf16>
    %cst_16 = arith.constant dense<0.000000e+00> : vector<8x128xf32>
    %31 = tpu.matmul %29, %30, %cst_16 {dimension_numbers = #tpu.dot_dimension_numbers<[1], [0], [0], [1], [0, 0, 1, 1], [], []>} : vector<8x128xbf16>, vector<128x128xbf16>, vector<8x128xf32> -> vector<8x128xf32>
    %c0_17 = arith.constant 0 : index
    %c0_18 = arith.constant 0 : index
    %32 = vector.load %arg7[%c0_17, %c0_18] : memref<1x128xf32, #tpu.memory_space<vmem>>, vector<1x128xf32>
    %33 = vector.broadcast %32 : vector<1x128xf32> to vector<8x128xf32>
    %34 = arith.addf %31, %33 : vector<8x128xf32>
    %cst_19 = arith.constant dense<0xFF800000> : vector<8xf32>
    %35 = vector.multi_reduction <maximumf>, %34, %cst_19 [1] : vector<8x128xf32> to vector<8xf32>
    %36 = vector.shape_cast %35 : vector<8xf32> to vector<8x1xf32>
    %37 = vector.broadcast %36 : vector<8x1xf32> to vector<8x128xf32>
    %38 = arith.subf %34, %37 : vector<8x128xf32>
    %39 = math.exp %38 : vector<8x128xf32>
    %cst_20 = arith.constant dense<0.000000e+00> : vector<8xf32>
    %40 = vector.multi_reduction <add>, %39, %cst_20 [1] : vector<8x128xf32> to vector<8xf32>
    %41 = vector.shape_cast %40 : vector<8xf32> to vector<8x1xf32>
    %42 = tpu.reciprocal %41 : vector<8x1xf32> -> vector<8x1xf32>
    %43 = vector.broadcast %42 : vector<8x1xf32> to vector<8x128xf32>
    %44 = arith.mulf %39, %43 : vector<8x128xf32>
    %45 = vector.extract_strided_slice %44 {offsets = [0, 0], sizes = [8, 10], strides = [1, 1]} : vector<8x128xf32> to vector<8x10xf32>
    %c0_21 = arith.constant 0 : index
    %c0_22 = arith.constant 0 : index
    %46 = vector.load %arg8[%c0_21, %c0_22] : memref<8x10xf32, #tpu.memory_space<vmem>>, vector<8x10xf32>
    tpu.vector_store %arg8[%c0_21, %c0_22], %45 {strides = array<i32>} : memref<8x10xf32, #tpu.memory_space<vmem>>, vector<8x10xf32>,
    return
  }
  func.func @transform_0(%arg0: i32) -> (i32, i32) {
    %c0_i32 = arith.constant 0 : i32
    %c0_i32_0 = arith.constant 0 : i32
    return %arg0, %c0_i32 : i32, i32
  }
  func.func @transform_1(%arg0: i32) -> (i32, i32) {
    %c0_i32 = arith.constant 0 : i32
    %c0_i32_0 = arith.constant 0 : i32
    %c0_i32_1 = arith.constant 0 : i32
    return %c0_i32, %c0_i32_0 : i32, i32
  }
  func.func @transform_2(%arg0: i32) -> (i32, i32) {
    %c0_i32 = arith.constant 0 : i32
    %c0_i32_0 = arith.constant 0 : i32
    %c0_i32_1 = arith.constant 0 : i32
    return %c0_i32, %c0_i32_0 : i32, i32
  }
  func.func @transform_3(%arg0: i32) -> (i32, i32) {
    %c0_i32 = arith.constant 0 : i32
    %c0_i32_0 = arith.constant 0 : i32
    %c0_i32_1 = arith.constant 0 : i32
    return %c0_i32, %c0_i32_0 : i32, i32
  }
  func.func @transform_4(%arg0: i32) -> (i32, i32) {
    %c0_i32 = arith.constant 0 : i32
    %c0_i32_0 = arith.constant 0 : i32
    %c0_i32_1 = arith.constant 0 : i32
    return %c0_i32, %c0_i32_0 : i32, i32
  }
  func.func @transform_5(%arg0: i32) -> (i32, i32) {
    %c0_i32 = arith.constant 0 : i32
    %c0_i32_0 = arith.constant 0 : i32
    %c0_i32_1 = arith.constant 0 : i32
    return %c0_i32, %c0_i32_0 : i32, i32
  }
  func.func @transform_6(%arg0: i32) -> (i32, i32) {
    %c0_i32 = arith.constant 0 : i32
    %c0_i32_0 = arith.constant 0 : i32
    %c0_i32_1 = arith.constant 0 : i32
    return %c0_i32, %c0_i32_0 : i32, i32
  }
  func.func @transform_7(%arg0: i32) -> (i32, i32) {
    %c0_i32 = arith.constant 0 : i32
    %c0_i32_0 = arith.constant 0 : i32
    return %arg0, %c0_i32 : i32, i32
  }
}

</mosaic_0001>

<llo_original>
// kernel: ssvae_forward.1
$region0: #{ssvae_forward.1}
  #allocation0 [shape = 'u32[]', space=smem, size = 0x4, offset = 0x4, fixed_abs, tag = 'smem constant byte address 0x4 - core index']
  #allocation1 [shape = 'u32[72,128]{1,0:T(1,128)}', space=vmem, size = 0x9000, scoped, tag = 'internal scratch']
  %s0 = inlined_call_operand.hbm [shape: f32[8,256], index: 0, kind: input, shape index: {}]
  %s1 = inlined_call_operand.hbm [shape: bf16[256,128], index: 1, kind: input, shape index: {}]
  %s2 = inlined_call_operand.vmem [shape: f32[1,128], index: 2, kind: input, shape index: {}]
  %s3 = inlined_call_operand.hbm [shape: bf16[128,128], index: 3, kind: input, shape index: {}]
  %s4 = inlined_call_operand.vmem [shape: f32[1,128], index: 4, kind: input, shape index: {}]
  %s5 = inlined_call_operand.hbm [shape: bf16[128,128], index: 5, kind: input, shape index: {}]
  %s6 = inlined_call_operand.vmem [shape: f32[1,128], index: 6, kind: input, shape index: {}]
  %s7 = inlined_call_operand.hbm [shape: f32[8,10], index: 7, kind: output, shape index: {}]
  %s8 = sld [smem:[#allocation0]]
  $region54: #{ssvae_forward.1} parent=0
    _
  %s10 = ssub.s32 1, %s8
  %s11 = scalar_select 0, %s10, %s8
  $region1: #{ssvae_forward.1} parent=0
    #allocation2 [shape = 'u8[8192]{0}', space=vmem, size = 0x2000, scoped, tag = 'input window, operand 0, single buffered']
    #allocation3 [shape = 's32[1]{0}', space=sflag, size = 0x4, scoped, tag = 'scoped memory for ssvae_forward.1']
    #allocation4 [shape = 's32[1]{0}', space=sflag, size = 0x4, scoped, tag = 'scoped memory for ssvae_forward.1']
    #allocation5 [shape = 'u8[65536]{0}', space=vmem, size = 0x10000, scoped, tag = 'input window, operand 1, single buffered']
    #allocation6 [shape = 's32[1]{0}', space=sflag, size = 0x4, scoped, tag = 'scoped memory for ssvae_forward.1']
    #allocation7 [shape = 'u8[32768]{0}', space=vmem, size = 0x8000, scoped, tag = 'input window, operand 3, single buffered']
    #allocation8 [shape = 'u8[32768]{0}', space=vmem, size = 0x8000, scoped, tag = 'input window, operand 5, single buffered']
    #allocation9 [shape = 's32[1]{0}', space=sflag, size = 0x4, scoped, tag = 'scoped memory for ssvae_forward.1']
    #allocation10 [shape = 'u8[4096]{0}', space=vmem, size = 0x1000, scoped, tag = 'output window, operand 0, single buffered']
    %12 = vsyncpa [#allocation3], 0
    %13 = vsyncpa [#allocation6], 0
    %14 = vsyncpa [#allocation9], 0
    %15 = vsyncpa [#allocation4], 0
    // Predicated region
    $region2: #{ssvae_forward.1} parent=1 // pred_check
      _
    $region3: #{ssvae_forward.1} parent=1 // pred_check_branch
      %17 = sbr.rel (0) target = $region5
    $region4: #{ssvae_forward.1} parent=1 // pred_region
      %19 = vsyncadd [#allocation3], 0
      %s21 = sshll.u32 %s0, 4
      %s22 = int_to_ptr.hbm [resolvable:$true] %s21
      %s23 = sshll.u32 [#allocation2], 4
      %s24 = int_to_ptr.vmem [resolvable:$true] %s23
      %26 = dma.hbm_to_vmem [thread:$0]  %s22, 256, %s24, [#allocation3]
    $region5: #{ssvae_forward.1} parent=1 // pred_fallthru
      _
    // Predicated region
    $region6: #{ssvae_forward.1} parent=1 // pred_check
      _
    $region7: #{ssvae_forward.1} parent=1 // pred_check_branch
      %28 = sbr.rel (0) target = $region9
    $region8: #{ssvae_forward.1} parent=1 // pred_region
      %30 = vsyncadd [#allocation6], 0
      %s31 = sshll.u32 %s1, 4
      %s32 = int_to_ptr.hbm [resolvable:$true] %s31
      %s33 = sshll.u32 [#allocation5], 4
      %s34 = int_to_ptr.vmem [resolvable:$true] %s33
      %39 = dma.hbm_to_vmem [thread:$0]  %s32, 2048, %s34, [#allocation6], 64, 64, 4
    $region9: #{ssvae_forward.1} parent=1 // pred_fallthru
      _
    // Predicated region
    $region10: #{ssvae_forward.1} parent=1 // pred_check
      _
    $region11: #{ssvae_forward.1} parent=1 // pred_check_branch
      %41 = sbr.rel (0) target = $region13
    $region12: #{ssvae_forward.1} parent=1 // pred_region
      _
    $region13: #{ssvae_forward.1} parent=1 // pred_fallthru
      _
    // Predicated region
    $region14: #{ssvae_forward.1} parent=1 // pred_check
      _
    $region15: #{ssvae_forward.1} parent=1 // pred_check_branch
      %43 = sbr.rel (0) target = $region17
    $region16: #{ssvae_forward.1} parent=1 // pred_region
      %45 = vsyncadd [#allocation6], 0
      %s46 = sshll.u32 %s3, 4
      %s47 = int_to_ptr.hbm [resolvable:$true] %s46
      %s48 = sshll.u32 [#allocation7], 4
      %s49 = int_to_ptr.vmem [resolvable:$true] %s48
      %54 = dma.hbm_to_vmem [thread:$0]  %s47, 1024, %s49, [#allocation6], 64, 64, 4
    $region17: #{ssvae_forward.1} parent=1 // pred_fallthru
      _
    // Predicated region
    $region18: #{ssvae_forward.1} parent=1 // pred_check
      _
    $region19: #{ssvae_forward.1} parent=1 // pred_check_branch
      %56 = sbr.rel (0) target = $region21
    $region20: #{ssvae_forward.1} parent=1 // pred_region
      _
    $region21: #{ssvae_forward.1} parent=1 // pred_fallthru
      _
    // Predicated region
    $region22: #{ssvae_forward.1} parent=1 // pred_check
      _
    $region23: #{ssvae_forward.1} parent=1 // pred_check_branch
      %58 = sbr.rel (0) target = $region25
    $region24: #{ssvae_forward.1} parent=1 // pred_region
      %60 = vsyncadd [#allocation9], 0
      %s61 = sshll.u32 %s5, 4
      %s62 = int_to_ptr.hbm [resolvable:$true] %s61
      %s63 = sshll.u32 [#allocation8], 4
      %s64 = int_to_ptr.vmem [resolvable:$true] %s63
      %69 = dma.hbm_to_vmem [thread:$0]  %s62, 1024, %s64, [#allocation9], 64, 64, 4
    $region25: #{ssvae_forward.1} parent=1 // pred_fallthru
      _
    // Predicated region
    $region26: #{ssvae_forward.1} parent=1 // pred_check
      _
    $region27: #{ssvae_forward.1} parent=1 // pred_check_branch
      %71 = sbr.rel (0) target = $region29
    $region28: #{ssvae_forward.1} parent=1 // pred_region
      _
    $region29: #{ssvae_forward.1} parent=1 // pred_fallthru
      _
    // Predicated region
    $region30: #{ssvae_forward.1} parent=1 // pred_check
      _
    $region31: #{ssvae_forward.1} parent=1 // pred_check_branch
      %73 = sbr.rel (0) target = $region33
    $region32: #{ssvae_forward.1} parent=1 // pred_region
      %75 = dma.done [#allocation3], 256
    $region33: #{ssvae_forward.1} parent=1 // pred_fallthru
      _
    // Predicated region
    $region34: #{ssvae_forward.1} parent=1 // pred_check
      _
    $region35: #{ssvae_forward.1} parent=1 // pred_check_branch
      %77 = sbr.rel (0) target = $region37
    $region36: #{ssvae_forward.1} parent=1 // pred_region
      %79 = dma.done [#allocation6], 2048
    $region37: #{ssvae_forward.1} parent=1 // pred_fallthru
      _
    // Predicated region
    $region38: #{ssvae_forward.1} parent=1 // pred_check
      _
    $region39: #{ssvae_forward.1} parent=1 // pred_check_branch
      %81 = sbr.rel (0) target = $region41
    $region40: #{ssvae_forward.1} parent=1 // pred_region
      %83 = dma.done [#allocation6], 1024
    $region41: #{ssvae_forward.1} parent=1 // pred_fallthru
      _
    // Predicated region
    $region42: #{ssvae_forward.1} parent=1 // pred_check
      _
    $region43: #{ssvae_forward.1} parent=1 // pred_check_branch
      %85 = sbr.rel (0) target = $region45
    $region44: #{ssvae_forward.1} parent=1 // pred_region
      %87 = dma.done [#allocation9], 1024
    $region45: #{ssvae_forward.1} parent=1 // pred_fallthru
      _
    %v88 = vld [vmem:[#allocation2] sm:$0xff]
    %v89 = vld [vmem:[#allocation2 + $0x8] sm:$0xff]
    %v90 = vpack.c.bf16 %v88, %v88
    %v91 = vpack.c.bf16 %v89, %v89
    %v92 = vld [vmem:[#allocation5] sm:$0xf]
    %v93 = vld [vmem:[#allocation5 + $0x4] sm:$0xf]
    %v94 = vld [vmem:[#allocation5 + $0x8] sm:$0xf]
    %v95 = vld [vmem:[#allocation5 + $0xc] sm:$0xf]
    %v96 = vld [vmem:[#allocation5 + $0x10] sm:$0xf]
    %v97 = vld [vmem:[#allocation5 + $0x14] sm:$0xf]
    %v98 = vld [vmem:[#allocation5 + $0x18] sm:$0xf]
    %v99 = vld [vmem:[#allocation5 + $0x1c] sm:$0xf]
    %v100 = vld [vmem:[#allocation5 + $0x20] sm:$0xf]
    %v101 = vld [vmem:[#allocation5 + $0x24] sm:$0xf]
    %v102 = vld [vmem:[#allocation5 + $0x28] sm:$0xf]
    %v103 = vld [vmem:[#allocation5 + $0x2c] sm:$0xf]
    %v104 = vld [vmem:[#allocation5 + $0x30] sm:$0xf]
    %v105 = vld [vmem:[#allocation5 + $0x34] sm:$0xf]
    %v106 = vld [vmem:[#allocation5 + $0x38] sm:$0xf]
    %v107 = vld [vmem:[#allocation5 + $0x3c] sm:$0xf]
    %v108 = vld [vmem:[#allocation5 + $0x40] sm:$0xf]
    %v109 = vld [vmem:[#allocation5 + $0x44] sm:$0xf]
    %v110 = vld [vmem:[#allocation5 + $0x48] sm:$0xf]
    %v111 = vld [vmem:[#allocation5 + $0x4c] sm:$0xf]
    %v112 = vld [vmem:[#allocation5 + $0x50] sm:$0xf]
    %v113 = vld [vmem:[#allocation5 + $0x54] sm:$0xf]
    %v114 = vld [vmem:[#allocation5 + $0x58] sm:$0xf]
    %v115 = vld [vmem:[#allocation5 + $0x5c] sm:$0xf]
    %v116 = vld [vmem:[#allocation5 + $0x60] sm:$0xf]
    %v117 = vld [vmem:[#allocation5 + $0x64] sm:$0xf]
    %v118 = vld [vmem:[#allocation5 + $0x68] sm:$0xf]
    %v119 = vld [vmem:[#allocation5 + $0x6c] sm:$0xf]
    %v120 = vld [vmem:[#allocation5 + $0x70] sm:$0xf]
    %v121 = vld [vmem:[#allocation5 + $0x74] sm:$0xf]
    %v122 = vld [vmem:[#allocation5 + $0x78] sm:$0xf]
    %v123 = vld [vmem:[#allocation5 + $0x7c] sm:$0xf]
    %v124 = vld [vmem:[%s2] sm:$0x1]
    %v126 = vperm.slane %v124, 0
    %v160 = vunpack.c.l.b16 %v92
    %v161 = vunpack.c.l.b16 %v93
    %v162 = vunpack.c.l.b16 %v94
    %v163 = vunpack.c.l.b16 %v95
    %v164 = vunpack.c.l.b16 %v96
    %v165 = vunpack.c.l.b16 %v97
    %v166 = vunpack.c.l.b16 %v98
    %v167 = vunpack.c.l.b16 %v99
    %v168 = vunpack.c.l.b16 %v100
    %v169 = vunpack.c.l.b16 %v101
    %v170 = vunpack.c.l.b16 %v102
    %v171 = vunpack.c.l.b16 %v103
    %v172 = vunpack.c.l.b16 %v104
    %v173 = vunpack.c.l.b16 %v105
    %v174 = vunpack.c.l.b16 %v106
    %v175 = vunpack.c.l.b16 %v107
    %v176 = vunpack.c.l.b16 %v108
    %v177 = vunpack.c.l.b16 %v109
    %v178 = vunpack.c.l.b16 %v110
    %v179 = vunpack.c.l.b16 %v111
    %v180 = vunpack.c.l.b16 %v112
    %v181 = vunpack.c.l.b16 %v113
    %v182 = vunpack.c.l.b16 %v114
    %v183 = vunpack.c.l.b16 %v115
    %v184 = vunpack.c.l.b16 %v116
    %v185 = vunpack.c.l.b16 %v117
    %v186 = vunpack.c.l.b16 %v118
    %v187 = vunpack.c.l.b16 %v119
    %v188 = vunpack.c.l.b16 %v120
    %v189 = vunpack.c.l.b16 %v121
    %v190 = vunpack.c.l.b16 %v122
    %v191 = vunpack.c.l.b16 %v123
    %v192 = vpack.c.b16 %v161, %v160
    %v193 = vpack.c.b16 %v163, %v162
    %v194 = vpack.c.b16 %v165, %v164
    %v195 = vpack.c.b16 %v167, %v166
    %v196 = vpack.c.b16 %v169, %v168
    %v197 = vpack.c.b16 %v171, %v170
    %v198 = vpack.c.b16 %v173, %v172
    %v199 = vpack.c.b16 %v175, %v174
    %v200 = vpack.c.b16 %v177, %v176
    %v201 = vpack.c.b16 %v179, %v178
    %v202 = vpack.c.b16 %v181, %v180
    %v203 = vpack.c.b16 %v183, %v182
    %v204 = vpack.c.b16 %v185, %v184
    %v205 = vpack.c.b16 %v187, %v186
    %v206 = vpack.c.b16 %v189, %v188
    %v207 = vpack.c.b16 %v191, %v190
    %224 = vmatpush.bf16.msra.mxu0 %v199
    %225 = vmatpush.bf16.msra.mxu0 %v198
    %226 = vmatpush.bf16.msra.mxu0 %v197
    %227 = vmatpush.bf16.msra.mxu0 %v196
    %228 = vmatpush.bf16.msra.mxu0 %v195
    %229 = vmatpush.bf16.msra.mxu0 %v194
    %230 = vmatpush.bf16.msra.mxu0 %v193
    %231 = vmatpush.bf16.msra.mxu0 %v192
    %232 = vmatmul.bf16.gmra.mxu0 %v90
    %v233 = vpop.f32.mrf.mxu0
    %v234 = vadd.f32 %v126, %v233
    %v235 = vpop.f32.mrf.mxu0
    %236 = vdwg.mxu0
    %237 = vmatpush.bf16.msra.mxu0 %v207
    %238 = vmatpush.bf16.msra.mxu0 %v206
    %239 = vmatpush.bf16.msra.mxu0 %v205
    %240 = vmatpush.bf16.msra.mxu0 %v204
    %241 = vmatpush.bf16.msra.mxu0 %v203
    %242 = vmatpush.bf16.msra.mxu0 %v202
    %243 = vmatpush.bf16.msra.mxu0 %v201
    %244 = vmatpush.bf16.msra.mxu0 %v200
    %245 = vmatmul.bf16.gmra.mxu0 %v91
    %v246 = vpop.f32.mrf.mxu0
    %v247 = vadd.f32 %v234, %v246
    %v248 = vpop.f32.mrf.mxu0
    %249 = vdwg.mxu0
    %v250 = vmax.f32 %v247, 0.0
    %v251 = vand.u32 2147483647, %v247
    %v252 = vsub.f32 0.0, %v251
    %v253 = vmul.f32 %v252, 1.442695
    %v254 = vpow.pop %v253
    %v255 = vadd.f32 %v254, 1.0
    %v256 = vlog2.pop %v255
    %v257 = vmul.f32 %v256, 0.6931472
    %v258 = vmul.f32 -0.5, %v254
    %v259 = vadd.f32 %v258, 1.0
    %v260 = vmul.f32 %v259, %v254
    %v261 = vand.u32 2147483647, %v254
    %vm262 = vcmp.lt.f32.partialorder %v261, 0.0004427343
    %v263 = vsel %vm262, %v260, %v257
    %v264 = vadd.f32 %v250, %v263
    %v265 = vpack.c.bf16 %v264, %v264
    %v266 = vld [vmem:[#allocation7] sm:$0xf]
    %v267 = vld [vmem:[#allocation7 + $0x4] sm:$0xf]
    %v268 = vld [vmem:[#allocation7 + $0x8] sm:$0xf]
    %v269 = vld [vmem:[#allocation7 + $0xc] sm:$0xf]
    %v270 = vld [vmem:[#allocation7 + $0x10] sm:$0xf]
    %v271 = vld [vmem:[#allocation7 + $0x14] sm:$0xf]
    %v272 = vld [vmem:[#allocation7 + $0x18] sm:$0xf]
    %v273 = vld [vmem:[#allocation7 + $0x1c] sm:$0xf]
    %v274 = vld [vmem:[#allocation7 + $0x20] sm:$0xf]
    %v275 = vld [vmem:[#allocation7 + $0x24] sm:$0xf]
    %v276 = vld [vmem:[#allocation7 + $0x28] sm:$0xf]
    %v277 = vld [vmem:[#allocation7 + $0x2c] sm:$0xf]
    %v278 = vld [vmem:[#allocation7 + $0x30] sm:$0xf]
    %v279 = vld [vmem:[#allocation7 + $0x34] sm:$0xf]
    %v280 = vld [vmem:[#allocation7 + $0x38] sm:$0xf]
    %v281 = vld [vmem:[#allocation7 + $0x3c] sm:$0xf]
    %v282 = vld [vmem:[%s4] sm:$0x1]
    %v284 = vperm.slane %v282, 0
    %v302 = vunpack.c.l.b16 %v266
    %v303 = vunpack.c.l.b16 %v267
    %v304 = vunpack.c.l.b16 %v268
    %v305 = vunpack.c.l.b16 %v269
    %v306 = vunpack.c.l.b16 %v270
    %v307 = vunpack.c.l.b16 %v271
    %v308 = vunpack.c.l.b16 %v272
    %v309 = vunpack.c.l.b16 %v273
    %v310 = vunpack.c.l.b16 %v274
    %v311 = vunpack.c.l.b16 %v275
    %v312 = vunpack.c.l.b16 %v276
    %v313 = vunpack.c.l.b16 %v277
    %v314 = vunpack.c.l.b16 %v278
    %v315 = vunpack.c.l.b16 %v279
    %v316 = vunpack.c.l.b16 %v280
    %v317 = vunpack.c.l.b16 %v281
    %v318 = vpack.c.b16 %v303, %v302
    %v319 = vpack.c.b16 %v305, %v304
    %v320 = vpack.c.b16 %v307, %v306
    %v321 = vpack.c.b16 %v309, %v308
    %v322 = vpack.c.b16 %v311, %v310
    %v323 = vpack.c.b16 %v313, %v312
    %v324 = vpack.c.b16 %v315, %v314
    %v325 = vpack.c.b16 %v317, %v316
    %334 = vmatpush.bf16.msra.mxu0 %v325
    %335 = vmatpush.bf16.msra.mxu0 %v324
    %336 = vmatpush.bf16.msra.mxu0 %v323
    %337 = vmatpush.bf16.msra.mxu0 %v322
    %338 = vmatpush.bf16.msra.mxu0 %v321
    %339 = vmatpush.bf16.msra.mxu0 %v320
    %340 = vmatpush.bf16.msra.mxu0 %v319
    %341 = vmatpush.bf16.msra.mxu0 %v318
    %342 = vmatmul.bf16.gmra.mxu0 %v265
    %v343 = vpop.f32.mrf.mxu0
    %v344 = vadd.f32 %v284, %v343
    %v345 = vpop.f32.mrf.mxu0
    %346 = vdwg.mxu0
    %v347 = vmax.f32 %v344, 0.0
    %v348 = vand.u32 2147483647, %v344
    %v349 = vsub.f32 0.0, %v348
    %v350 = vmul.f32 %v349, 1.442695
    %v351 = vpow.pop %v350
    %v352 = vadd.f32 %v351, 1.0
    %v353 = vlog2.pop %v352
    %v354 = vmul.f32 %v353, 0.6931472
    %v355 = vmul.f32 -0.5, %v351
    %v356 = vadd.f32 %v355, 1.0
    %v357 = vmul.f32 %v356, %v351
    %v358 = vand.u32 2147483647, %v351
    %vm359 = vcmp.lt.f32.partialorder %v358, 0.0004427343
    %v360 = vsel %vm359, %v357, %v354
    %v361 = vadd.f32 %v347, %v360
    %v362 = vpack.c.bf16 %v361, %v361
    %v363 = vld [vmem:[#allocation8] sm:$0xf]
    %v364 = vld [vmem:[#allocation8 + $0x4] sm:$0xf]
    %v365 = vld [vmem:[#allocation8 + $0x8] sm:$0xf]
    %v366 = vld [vmem:[#allocation8 + $0xc] sm:$0xf]
    %v367 = vld [vmem:[#allocation8 + $0x10] sm:$0xf]
    %v368 = vld [vmem:[#allocation8 + $0x14] sm:$0xf]
    %v369 = vld [vmem:[#allocation8 + $0x18] sm:$0xf]
    %v370 = vld [vmem:[#allocation8 + $0x1c] sm:$0xf]
    %v371 = vld [vmem:[#allocation8 + $0x20] sm:$0xf]
    %v372 = vld [vmem:[#allocation8 + $0x24] sm:$0xf]
    %v373 = vld [vmem:[#allocation8 + $0x28] sm:$0xf]
    %v374 = vld [vmem:[#allocation8 + $0x2c] sm:$0xf]
    %v375 = vld [vmem:[#allocation8 + $0x30] sm:$0xf]
    %v376 = vld [vmem:[#allocation8 + $0x34] sm:$0xf]
    %v377 = vld [vmem:[#allocation8 + $0x38] sm:$0xf]
    %v378 = vld [vmem:[#allocation8 + $0x3c] sm:$0xf]
    %v379 = vld [vmem:[%s6] sm:$0x1]
    %v381 = vperm.slane %v379, 0
    %v399 = vunpack.c.l.b16 %v363
    %v400 = vunpack.c.l.b16 %v364
    %v401 = vunpack.c.l.b16 %v365
    %v402 = vunpack.c.l.b16 %v366
    %v403 = vunpack.c.l.b16 %v367
    %v404 = vunpack.c.l.b16 %v368
    %v405 = vunpack.c.l.b16 %v369
    %v406 = vunpack.c.l.b16 %v370
    %v407 = vunpack.c.l.b16 %v371
    %v408 = vunpack.c.l.b16 %v372
    %v409 = vunpack.c.l.b16 %v373
    %v410 = vunpack.c.l.b16 %v374
    %v411 = vunpack.c.l.b16 %v375
    %v412 = vunpack.c.l.b16 %v376
    %v413 = vunpack.c.l.b16 %v377
    %v414 = vunpack.c.l.b16 %v378
    %v415 = vpack.c.b16 %v400, %v399
    %v416 = vpack.c.b16 %v402, %v401
    %v417 = vpack.c.b16 %v404, %v403
    %v418 = vpack.c.b16 %v406, %v405
    %v419 = vpack.c.b16 %v408, %v407
    %v420 = vpack.c.b16 %v410, %v409
    %v421 = vpack.c.b16 %v412, %v411
    %v422 = vpack.c.b16 %v414, %v413
    %431 = vmatpush.bf16.msra.mxu0 %v422
    %432 = vmatpush.bf16.msra.mxu0 %v421
    %433 = vmatpush.bf16.msra.mxu0 %v420
    %434 = vmatpush.bf16.msra.mxu0 %v419
    %435 = vmatpush.bf16.msra.mxu0 %v418
    %436 = vmatpush.bf16.msra.mxu0 %v417
    %437 = vmatpush.bf16.msra.mxu0 %v416
    %438 = vmatpush.bf16.msra.mxu0 %v415
    %439 = vmatmul.bf16.gmra.mxu0 %v362
    %v440 = vpop.f32.mrf.mxu0
    %v441 = vadd.f32 %v381, %v440
    %v442 = vpop.f32.mrf.mxu0
    %443 = vdwg.mxu0
    %444 = vmax.xlane.f32.xlu0 %v441
    %v445 = vpop.xlane.xlu0 %444
    %v446 = vsub.f32 %v441, %v445
    %v447 = vmul.f32 %v446, 1.442695
    %v448 = vpow.pop %v447
    %449 = vadd.xlane.f32.xlu0 %v448
    %v450 = vpop.xlane.xlu0 %449
    %v451 = vrcp.pop %v450
    %v452 = vmul.f32 %v450, %v451
    %v453 = vsub.f32 1.0, %v452
    %v454 = vmul.f32 %v451, %v453
    %v455 = vadd.f32 %v451, %v454
    %vm456 = vweird.f32 %v450
    %vm457 = vweird.f32 %v451
    %vm458 = vmor %vm456, %vm457
    %v459 = vsel %vm458, %v451, %v455
    %v460 = vand.u32 2147483647, %v450
    %vm461 = vcmp.eq.f32.partialorder %v460, 8.507059e+37
    %v462 = vand.u32 %v450, 2147483648
    %v463 = vor.u32 1.1754944e-38, %v462
    %v464 = vsel %vm461, %v463, %v459
    %v465 = vmul.f32 %v448, %v464
    %vm466 = vcmask 80896
    %467 = vst.msk [vmem:[#allocation10] sm:$0xff] %vm466, %v465
    // Predicated region
    $region46: #{ssvae_forward.1} parent=1 // pred_check
      _
    $region47: #{ssvae_forward.1} parent=1 // pred_check_branch
      %469 = sbr.rel (0) target = $region49
    $region48: #{ssvae_forward.1} parent=1 // pred_region
      %471 = vsyncadd [#allocation4], 0
      %s473 = sshll.u32 [#allocation10], 4
      %s474 = int_to_ptr.vmem [resolvable:$true] %s473
      %s475 = sshll.u32 %s7, 4
      %s476 = int_to_ptr.hbm [resolvable:$true] %s475
      %478 = dma.vmem_to_hbm [thread:$0]  %s474, 128, %s476, [#allocation4]
    $region49: #{ssvae_forward.1} parent=1 // pred_fallthru
      _
    // Predicated region
    $region50: #{ssvae_forward.1} parent=1 // pred_check
      _
    $region51: #{ssvae_forward.1} parent=1 // pred_check_branch
      %480 = sbr.rel (0) target = $region53
    $region52: #{ssvae_forward.1} parent=1 // pred_region
      %482 = dma.done [#allocation4], 128
    $region53: #{ssvae_forward.1} parent=1 // pred_fallthru
      _
    %483 = vsyncpa [#allocation3], 1
    %484 = vsyncpa [#allocation6], 1
    %485 = vsyncpa [#allocation9], 1
    %486 = vsyncpa [#allocation4], 1

</llo_original>
